<compile_context>
chip_gen: v5e
topology: v5e:2x2
jax: 0.10.0
libtpu: 0.0.40
codegen_flags: <defaults>
</compile_context>

<pallas_src>
import functools

import jax
import jax.numpy as jnp
from jax.experimental import pallas as pl
from jax.experimental.pallas import tpu as pltpu


# --------------------------------------------------------------------------
# Host-side (trace-time) parameter packing.
# --------------------------------------------------------------------------
def _pack_fused_params(params, H, H2):
    """Split-pack the bidirectional LSTM weights for the hoisted-x kernel.

    Returns
      w_x: (H,    4*G)  x-projection weights (both directions, gate-major)
      w_h: (G,    4*G)  recurrent weights, block-diagonal per direction
      b  : (1,    4*G)  pre-summed bias (b_ih + b_hh)
    with G = 2*H2 and columns [i_f,i_b, f_f,f_b, g_f,g_b, o_f,o_b].
    The i/f/o columns (and bias) are pre-scaled by 0.5 so a single tanh over
    the gate row yields sigmoid(i,f,o) = 0.5*t + 0.5 and tanh(g) = t.
    Lane-dense (128-wide) gate rows require H2 % 16 == 0 (H % 32 == 0);
    other sizes still work but produce lane-masked rows.
    """
    w_ih, w_hh = params["w_ih"], params["w_hh"]      # (2,H,4H2), (2,H2,4H2)
    b_ih, b_hh = params["b_ih"], params["b_hh"]      # (2,1,4H2)
    G = 2 * H2

    def interleave(fwd, bwd):
        # Gate-major (i,f,g,o) per direction -> [i_f,i_b,f_f,f_b,g_f,g_b,o_f,o_b]
        return jnp.concatenate(
            [blk for k in range(4)
             for blk in (fwd[:, k * H2:(k + 1) * H2],
                         bwd[:, k * H2:(k + 1) * H2])],
            axis=1)

    zeros_h = jnp.zeros((H2, 4 * H2), w_hh.dtype)
    w_x = interleave(w_ih[0], w_ih[1])                          # (H,  4*G)
    w_h = jnp.concatenate([
        interleave(w_hh[0], zeros_h),                           # h_fwd rows
        interleave(zeros_h, w_hh[1]),                           # h_bwd rows
    ], axis=0)                                                  # (G,  4*G)
    b = interleave(b_ih[0] + b_hh[0], b_ih[1] + b_hh[1])        # (1,  4*G)

    # tanh-form sigmoid pre-scale (exact: multiply by 0.5, a power of two).
    scale = jnp.ones((4 * G,), w_x.dtype)
    scale = scale.at[0:2 * G].set(0.5)       # i, f columns
    scale = scale.at[3 * G:4 * G].set(0.5)   # o columns
    return ((w_x * scale).astype(jnp.float32),
            (w_h * scale).astype(jnp.float32),
            (b * scale).astype(jnp.float32))


# --------------------------------------------------------------------------
# Pallas kernel: T fused bidirectional LSTM steps, weights VMEM-resident.
# --------------------------------------------------------------------------
def _fused_bilstm_seq_kernel(x_seq_ref, h0_ref, c0_ref, wx_ref, wh_ref, b_ref,
                             out_ref, hn_ref, cn_ref, xwb_ref,
                             *, seq_len, hidden2):
    G = 2 * hidden2                                  # fwd||bwd state width

    # Hoisted input projection + bias: one streaming (T, H) x (H, 4G) MXU
    # matmul for the whole sequence, off the serial h->c dependency chain.
    xwb_ref[...] = (jnp.dot(x_seq_ref[...], wx_ref[...],
                            preferred_element_type=jnp.float32) + b_ref[...])

    wh = wh_ref[...]                                 # (G, 4G), loaded once

    def step(t, carry):
        h, c = carry                                 # (1, G) each, [fwd | bwd]
        # Only the recurrent half of the contraction remains per step.
        gates = xwb_ref[pl.ds(t, 1), :] + jnp.dot(
            h, wh, preferred_element_type=jnp.float32)           # (1, 4G)
        tg = jnp.tanh(gates)                         # single lane-dense EUP pass
        i = 0.5 * tg[:, 0 * G:1 * G] + 0.5           # sigmoid via tanh identity
        f = 0.5 * tg[:, 1 * G:2 * G] + 0.5
        g = tg[:, 2 * G:3 * G]                       # tanh(g preact)
        o = 0.5 * tg[:, 3 * G:4 * G] + 0.5
        c_new = f * c + i * g                        # (1, G), both directions
        h_new = o * jnp.tanh(c_new)                  # (1, G) = [h_fwd | h_bwd]
        # TODO(synk): buffer 8 steps in an (8, G) scratch and flush once per 8
        # steps if a bundle dump ever shows store-slot pressure (off the serial
        # critical path today).
        out_ref[pl.ds(t, 1), :] = h_new              # per-token concat output
        return h_new, c_new

    # Bounded unroll: full unroll only for short sequences so instruction
    # memory / vreg live ranges don't scale with T.
    unroll = True if seq_len <= 8 else 8
    h_fin, c_fin = jax.lax.fori_loop(
        0, seq_len, step, (h0_ref[...], c0_ref[...]), unroll=unroll)
    hn_ref[...] = h_fin
    cn_ref[...] = c_fin


def _run_bilstm(x_seq, h0_row, c0_row, w_x, w_h, b, H2):
    T, _ = x_seq.shape
    G = 2 * H2
    vmem = lambda: pl.BlockSpec(memory_space=pltpu.MemorySpace.VMEM)
    kernel = functools.partial(_fused_bilstm_seq_kernel, seq_len=T, hidden2=H2)
    # No grid: single invocation, weights + the whole embedded sequence + the
    # precomputed gate buffer (a few KiB at these shapes) sit whole in VMEM.
    return pl.pallas_call(
        kernel,
        out_shape=(
            jax.ShapeDtypeStruct((T, G), jnp.float32),   # per-token outputs
            jax.ShapeDtypeStruct((1, G), jnp.float32),   # h_n row
            jax.ShapeDtypeStruct((1, G), jnp.float32),   # c_n row
        ),
        in_specs=[vmem() for _ in range(6)],
        out_specs=(vmem(), vmem(), vmem()),
        scratch_shapes=[pltpu.VMEM((T, 4 * G), jnp.float32)],   # hoisted xWb
    )(x_seq, h0_row, c0_row, w_x, w_h, b)


# --------------------------------------------------------------------------
# Public wrappers mirroring EncoderRNN.
# --------------------------------------------------------------------------
def encoder_rnn_encode_sequence(params, token_ids, hidden):
    """T successive EncoderRNN.forward calls (hidden carried between them),
    executed in a single pallas_call.

    Returns (outputs (T,1,H), (h_n, c_n) each (2,1,H2))."""
    emb = params["embedding"]
    H = emb.shape[1]
    h0, c0 = hidden
    H2 = h0.shape[-1]
    G = 2 * H2
    token_ids = jnp.asarray(token_ids, jnp.int32).reshape(-1)
    T = token_ids.shape[0]

    # TODO(synk): the embedding row gather stays as a JAX gather (one gather
    # per sequence); it could move in-kernel via scalar-prefetched ids + a
    # pl.Element(1) BlockSpec if the embedded-sequence DMA ever matters.
    x_seq = emb[token_ids].astype(jnp.float32)                  # (T, H)

    w_x, w_h, b = _pack_fused_params(params, H, H2)

    h0_row = h0.reshape(1, G).astype(jnp.float32)               # [h_fwd | h_bwd]
    c0_row = c0.reshape(1, G).astype(jnp.float32)

    out_seq, hn_row, cn_row = _run_bilstm(x_seq, h0_row, c0_row, w_x, w_h, b, H2)

    outputs = out_seq.reshape(T, 1, H)                          # (T, batch=1, H)
    h_n = hn_row.reshape(2, 1, H2)                              # PyTorch layout
    c_n = cn_row.reshape(2, 1, H2)
    return outputs, (h_n, c_n)


def encoder_rnn_forward(params, token_idx, hidden):
    """Mirror of EncoderRNN.forward: one token, seq_len=1, batch=1."""
    H = params["embedding"].shape[1]
    ids = jnp.asarray(token_idx, jnp.int32).reshape(1)
    outputs, hidden_out = encoder_rnn_encode_sequence(params, ids, hidden)
    return outputs.reshape(1, 1, H), hidden_out


def init_hidden(hidden_size):
    """Mirror of EncoderRNN.initHidden()."""
    H2 = hidden_size // 2
    return (jnp.zeros((2, 1, H2), jnp.float32),
            jnp.zeros((2, 1, H2), jnp.float32))


# --------------------------------------------------------------------------
# Pure-JAX reference (unfused, exact sigmoid/tanh) for correctness checking.
# --------------------------------------------------------------------------
def _reference_forward(params, token_idx, hidden):
    emb = params["embedding"]
    w_ih, w_hh = params["w_ih"], params["w_hh"]
    b_ih, b_hh = params["b_ih"], params["b_hh"]
    h0, c0 = hidden
    H2 = h0.shape[-1]
    x = emb[token_idx][None, :]
    hs, cs = [], []
    for d in range(2):
        gates = x @ w_ih[d] + h0[d] @ w_hh[d] + b_ih[d] + b_hh[d]
        i = jax.nn.sigmoid(gates[:, 0 * H2:1 * H2])
        f = jax.nn.sigmoid(gates[:, 1 * H2:2 * H2])
        g = jnp.tanh(gates[:, 2 * H2:3 * H2])
        o = jax.nn.sigmoid(gates[:, 3 * H2:4 * H2])
        c = f * c0[d] + i * g
        h = o * jnp.tanh(c)
        hs.append(h)
        cs.append(c)
    out = jnp.concatenate(hs, axis=-1).reshape(1, 1, -1)
    return out, (jnp.stack(hs, 0), jnp.stack(cs, 0))


def _reference_sequence(params, token_ids, hidden):
    outs = []
    for t in range(token_ids.shape[0]):
        out, hidden = _reference_forward(params, token_ids[t], hidden)
        outs.append(out[0])
    return jnp.stack(outs, 0), hidden


if __name__ == "__main__":
    key = jax.random.PRNGKey(0)
    V = 37            # input_size (vocab size)
    H = 32            # hidden_size
    H2 = H // 2       # per-direction hidden (bidirectionality=True)
    T = 8             # tokens in the demo sequence

    ks = jax.random.split(key, 8)
    bound = 1.0 / float(jnp.sqrt(jnp.float32(H2)))
    params = {
        # nn.Embedding default init: N(0, 1)
        "embedding": jax.random.normal(ks[0], (V, H), jnp.float32),
        # nn.LSTM default init: U(-1/sqrt(H2), 1/sqrt(H2)); stored transposed,
        # gate-major (i, f, g, o) columns, [forward, reverse] stacked on dim 0.
        "w_ih": jax.random.uniform(ks[1], (2, H, 4 * H2), jnp.float32, -bound, bound),
        "w_hh": jax.random.uniform(ks[2], (2, H2, 4 * H2), jnp.float32, -bound, bound),
        "b_ih": jax.random.uniform(ks[3], (2, 1, 4 * H2), jnp.float32, -bound, bound),
        "b_hh": jax.random.uniform(ks[4], (2, 1, 4 * H2), jnp.float32, -bound, bound),
    }

    token_ids = jax.random.randint(ks[5], (T,), 0, V, jnp.int32)
    # initHidden() gives zeros; use small random state to exercise the h@W_hh path.
    h0 = 0.1 * jax.random.normal(ks[6], (2, 1, H2), jnp.float32)
    c0 = 0.1 * jax.random.normal(ks[7], (2, 1, H2), jnp.float32)

    # Single-token forward (exact EncoderRNN.forward semantics).
    out1, (h1, c1) = encoder_rnn_forward(params, token_ids[0], (h0, c0))
    # Whole sequence in one kernel launch (hidden carried in-kernel across tokens).
    out_seq, (h_n, c_n) = encoder_rnn_encode_sequence(params, token_ids, (h0, c0))
    jax.block_until_ready((out1, h1, c1, out_seq, h_n, c_n))

    ref1, (rh1, rc1) = _reference_forward(params, token_ids[0], (h0, c0))
    ref_seq, (rh, rc) = _reference_sequence(params, token_ids, (h0, c0))

    assert out1.shape == (1, 1, H) and h1.shape == (2, 1, H2) and c1.shape == (2, 1, H2)
    assert out_seq.shape == (T, 1, H) and h_n.shape == (2, 1, H2) and c_n.shape == (2, 1, H2)
    # Exact tanh-form gates (no approx reciprocal) => tight agreement.
    tol = dict(atol=1e-4, rtol=1e-4)
    assert jnp.allclose(out1, ref1, **tol)
    assert jnp.allclose(h1, rh1, **tol) and jnp.allclose(c1, rc1, **tol)
    assert jnp.allclose(out_seq, ref_seq, **tol)
    assert jnp.allclose(h_n, rh, **tol) and jnp.allclose(c_n, rc, **tol)
    print("KERNEL_OK")
</pallas_src>

<mosaic_0001>
module attributes {stable_mosaic.version = 11 : i64} {
  func.func @_fused_bilstm_seq_kernel(%arg0: memref<1x32xf32, #tpu.memory_space<vmem>>, %arg1: memref<1x32xf32, #tpu.memory_space<vmem>>, %arg2: memref<1x32xf32, #tpu.memory_space<vmem>>, %arg3: memref<32x128xf32, #tpu.memory_space<vmem>>, %arg4: memref<32x128xf32, #tpu.memory_space<vmem>>, %arg5: memref<1x128xf32, #tpu.memory_space<vmem>>, %arg6: memref<1x32xf32, #tpu.memory_space<vmem>>, %arg7: memref<1x32xf32, #tpu.memory_space<vmem>>, %arg8: memref<1x32xf32, #tpu.memory_space<vmem>>, %arg9: memref<1x128xf32, #tpu.memory_space<vmem>>) attributes {dimension_semantics = [], scalar_prefetch = 0 : i64, scratch_operands = 1 : i64, tpu.core_type = #tpu.core_type<tc>} {
    %c0 = arith.constant 0 : index
    %c0_0 = arith.constant 0 : index
    %0 = vector.load %arg0[%c0, %c0_0] : memref<1x32xf32, #tpu.memory_space<vmem>>, vector<1x32xf32>
    %c0_1 = arith.constant 0 : index
    %c0_2 = arith.constant 0 : index
    %1 = vector.load %arg3[%c0_1, %c0_2] : memref<32x128xf32, #tpu.memory_space<vmem>>, vector<32x128xf32>
    %cst = arith.constant dense<0.000000e+00> : vector<1x128xf32>
    %2 = tpu.matmul %0, %1, %cst {dimension_numbers = #tpu.dot_dimension_numbers<[1], [0], [0], [1], [0, 0, 1, 1], [], []>} : vector<1x32xf32>, vector<32x128xf32>, vector<1x128xf32> -> vector<1x128xf32>
    %c0_3 = arith.constant 0 : index
    %c0_4 = arith.constant 0 : index
    %3 = vector.load %arg5[%c0_3, %c0_4] : memref<1x128xf32, #tpu.memory_space<vmem>>, vector<1x128xf32>
    %4 = arith.addf %2, %3 : vector<1x128xf32>
    %c0_5 = arith.constant 0 : index
    %c0_6 = arith.constant 0 : index
    %5 = vector.load %arg9[%c0_5, %c0_6] : memref<1x128xf32, #tpu.memory_space<vmem>>, vector<1x128xf32>
    tpu.vector_store %arg9[%c0_5, %c0_6], %4 {strides = array<i32>} : memref<1x128xf32, #tpu.memory_space<vmem>>, vector<1x128xf32>,
    %c0_7 = arith.constant 0 : index
    %c0_8 = arith.constant 0 : index
    %6 = vector.load %arg4[%c0_7, %c0_8] : memref<32x128xf32, #tpu.memory_space<vmem>>, vector<32x128xf32>
    %c0_9 = arith.constant 0 : index
    %c0_10 = arith.constant 0 : index
    %7 = vector.load %arg1[%c0_9, %c0_10] : memref<1x32xf32, #tpu.memory_space<vmem>>, vector<1x32xf32>
    %c0_11 = arith.constant 0 : index
    %c0_12 = arith.constant 0 : index
    %8 = vector.load %arg2[%c0_11, %c0_12] : memref<1x32xf32, #tpu.memory_space<vmem>>, vector<1x32xf32>
    %c0_i32 = arith.constant 0 : i32
    %9 = arith.index_cast %c0_i32 : i32 to index
    %c0_13 = arith.constant 0 : index
    %10 = vector.load %arg9[%9, %c0_13] : memref<1x128xf32, #tpu.memory_space<vmem>>, vector<1x128xf32>
    %cst_14 = arith.constant dense<0.000000e+00> : vector<1x128xf32>
    %11 = tpu.matmul %7, %6, %cst_14 {dimension_numbers = #tpu.dot_dimension_numbers<[1], [0], [0], [1], [0, 0, 1, 1], [], []>} : vector<1x32xf32>, vector<32x128xf32>, vector<1x128xf32> -> vector<1x128xf32>
    %12 = arith.addf %10, %11 : vector<1x128xf32>
    %13 = math.tanh %12 : vector<1x128xf32>
    %14 = vector.extract_strided_slice %13 {offsets = [0, 0], sizes = [1, 32], strides = [1, 1]} : vector<1x128xf32> to vector<1x32xf32>
    %cst_15 = arith.constant 5.000000e-01 : f32
    %15 = vector.broadcast %cst_15 : f32 to vector<1x32xf32>
    %16 = arith.mulf %15, %14 : vector<1x32xf32>
    %cst_16 = arith.constant 5.000000e-01 : f32
    %17 = vector.broadcast %cst_16 : f32 to vector<1x32xf32>
    %18 = arith.addf %16, %17 : vector<1x32xf32>
    %19 = vector.extract_strided_slice %13 {offsets = [0, 32], sizes = [1, 32], strides = [1, 1]} : vector<1x128xf32> to vector<1x32xf32>
    %cst_17 = arith.constant 5.000000e-01 : f32
    %20 = vector.broadcast %cst_17 : f32 to vector<1x32xf32>
    %21 = arith.mulf %20, %19 : vector<1x32xf32>
    %cst_18 = arith.constant 5.000000e-01 : f32
    %22 = vector.broadcast %cst_18 : f32 to vector<1x32xf32>
    %23 = arith.addf %21, %22 : vector<1x32xf32>
    %24 = vector.extract_strided_slice %13 {offsets = [0, 64], sizes = [1, 32], strides = [1, 1]} : vector<1x128xf32> to vector<1x32xf32>
    %25 = vector.extract_strided_slice %13 {offsets = [0, 96], sizes = [1, 32], strides = [1, 1]} : vector<1x128xf32> to vector<1x32xf32>
    %cst_19 = arith.constant 5.000000e-01 : f32
    %26 = vector.broadcast %cst_19 : f32 to vector<1x32xf32>
    %27 = arith.mulf %26, %25 : vector<1x32xf32>
    %cst_20 = arith.constant 5.000000e-01 : f32
    %28 = vector.broadcast %cst_20 : f32 to vector<1x32xf32>
    %29 = arith.addf %27, %28 : vector<1x32xf32>
    %30 = arith.mulf %23, %8 : vector<1x32xf32>
    %31 = arith.mulf %18, %24 : vector<1x32xf32>
    %32 = arith.addf %30, %31 : vector<1x32xf32>
    %33 = math.tanh %32 : vector<1x32xf32>
    %34 = arith.mulf %29, %33 : vector<1x32xf32>
    %35 = arith.index_cast %c0_i32 : i32 to index
    %c0_21 = arith.constant 0 : index
    %36 = vector.load %arg6[%35, %c0_21] : memref<1x32xf32, #tpu.memory_space<vmem>>, vector<1x32xf32>
    tpu.vector_store %arg6[%35, %c0_21], %34 {strides = array<i32>} : memref<1x32xf32, #tpu.memory_space<vmem>>, vector<1x32xf32>,
    %c1_i32 = arith.constant 1 : i32
    %c0_22 = arith.constant 0 : index
    %c0_23 = arith.constant 0 : index
    %37 = vector.load %arg7[%c0_22, %c0_23] : memref<1x32xf32, #tpu.memory_space<vmem>>, vector<1x32xf32>
    tpu.vector_store %arg7[%c0_22, %c0_23], %34 {strides = array<i32>} : memref<1x32xf32, #tpu.memory_space<vmem>>, vector<1x32xf32>,
    %c0_24 = arith.constant 0 : index
    %c0_25 = arith.constant 0 : index
    %38 = vector.load %arg8[%c0_24, %c0_25] : memref<1x32xf32, #tpu.memory_space<vmem>>, vector<1x32xf32>
    tpu.vector_store %arg8[%c0_24, %c0_25], %32 {strides = array<i32>} : memref<1x32xf32, #tpu.memory_space<vmem>>, vector<1x32xf32>,
    return
  }
}

</mosaic_0001>

<llo_original>
// kernel: tpu_custom_call.1
$region0: #{tpu_custom_call.1}
  #allocation0 [shape = 'u32[]', space=smem, size = 0x4, offset = 0x4, fixed_abs, tag = 'smem constant byte address 0x4 - core index']
  #allocation1 [shape = 'u32[72,128]{1,0:T(1,128)}', space=vmem, size = 0x9000, scoped, tag = 'internal scratch']
  #allocation2 [shape = 'f32[1,128]{1,0:T(1,128)}', space=vmem, size = 0x200, scoped, tag = 'scratch operand']
  %s0 = inlined_call_operand.hbm [shape: f32[1,32], index: 0, kind: input, shape index: {}]
  %s1 = inlined_call_operand.hbm [shape: f32[1,32], index: 1, kind: input, shape index: {}]
  %s2 = inlined_call_operand.vmem [shape: f32[1,32], index: 2, kind: input, shape index: {}]
  %s3 = inlined_call_operand.hbm [shape: f32[32,128], index: 3, kind: input, shape index: {}]
  %s4 = inlined_call_operand.hbm [shape: f32[32,128], index: 4, kind: input, shape index: {}]
  %s5 = inlined_call_operand.vmem [shape: f32[1,128], index: 5, kind: input, shape index: {}]
  %s6 = inlined_call_operand.hbm [shape: f32[1,32], index: 6, kind: output, shape index: {0}]
  %s7 = inlined_call_operand.hbm [shape: f32[1,32], index: 7, kind: output, shape index: {1}]
  %s8 = inlined_call_operand.hbm [shape: f32[1,32], index: 8, kind: output, shape index: {2}]
  %9 = xla_tuple %s6, %s7, %s8
  %s10 = sld [smem:[#allocation0]]
  $region66: #{tpu_custom_call.1} parent=0
    _
  %s12 = ssub.s32 1, %s10
  %s13 = scalar_select 0, %s12, %s10
  $region1: #{tpu_custom_call.1} parent=0
    #allocation3 [shape = 'u8[512]{0}', space=vmem, size = 0x400, scoped, tag = 'input window, operand 0, single buffered']
    #allocation4 [shape = 's32[1]{0}', space=sflag, size = 0x4, scoped, tag = 'scoped memory for tpu_custom_call.1']
    #allocation5 [shape = 's32[1]{0}', space=sflag, size = 0x4, scoped, tag = 'scoped memory for tpu_custom_call.1']
    #allocation6 [shape = 'u8[512]{0}', space=vmem, size = 0x400, scoped, tag = 'input window, operand 1, single buffered']
    #allocation7 [shape = 's32[1]{0}', space=sflag, size = 0x4, scoped, tag = 'scoped memory for tpu_custom_call.1']
    #allocation8 [shape = 'u8[16384]{0}', space=vmem, size = 0x4000, scoped, tag = 'input window, operand 3, single buffered']
    #allocation9 [shape = 'u8[16384]{0}', space=vmem, size = 0x4000, scoped, tag = 'input window, operand 4, single buffered']
    #allocation10 [shape = 's32[1]{0}', space=sflag, size = 0x4, scoped, tag = 'scoped memory for tpu_custom_call.1']
    #allocation11 [shape = 'u8[512]{0}', space=vmem, size = 0x400, scoped, tag = 'output window, operand 0, single buffered']
    #allocation12 [shape = 'u8[512]{0}', space=vmem, size = 0x400, scoped, tag = 'output window, operand 1, single buffered']
    #allocation13 [shape = 's32[1]{0}', space=sflag, size = 0x4, scoped, tag = 'scoped memory for tpu_custom_call.1']
    #allocation14 [shape = 'u8[512]{0}', space=vmem, size = 0x400, scoped, tag = 'output window, operand 2, single buffered']
    %14 = vsyncpa [#allocation4], 0
    %15 = vsyncpa [#allocation7], 0
    %16 = vsyncpa [#allocation10], 0
    %17 = vsyncpa [#allocation5], 0
    %18 = vsyncpa [#allocation13], 0
    // Predicated region
    $region2: #{tpu_custom_call.1} parent=1 // pred_check
      _
    $region3: #{tpu_custom_call.1} parent=1 // pred_check_branch
      %20 = sbr.rel (0) target = $region5
    $region4: #{tpu_custom_call.1} parent=1 // pred_region
      %22 = vsyncadd [#allocation4], 0
      %s24 = sshll.u32 %s0, 4
      %s25 = int_to_ptr.hbm [resolvable:$true] %s24
      %s26 = sshll.u32 [#allocation3], 4
      %s27 = int_to_ptr.vmem [resolvable:$true] %s26
      %29 = dma.hbm_to_vmem [thread:$0]  %s25, 16, %s27, [#allocation4]
    $region5: #{tpu_custom_call.1} parent=1 // pred_fallthru
      _
    // Predicated region
    $region6: #{tpu_custom_call.1} parent=1 // pred_check
      _
    $region7: #{tpu_custom_call.1} parent=1 // pred_check_branch
      %31 = sbr.rel (0) target = $region9
    $region8: #{tpu_custom_call.1} parent=1 // pred_region
      %33 = vsyncadd [#allocation7], 0
      %s35 = sshll.u32 %s1, 4
      %s36 = int_to_ptr.hbm [resolvable:$true] %s35
      %s37 = sshll.u32 [#allocation6], 4
      %s38 = int_to_ptr.vmem [resolvable:$true] %s37
      %40 = dma.hbm_to_vmem [thread:$0]  %s36, 16, %s38, [#allocation7]
    $region9: #{tpu_custom_call.1} parent=1 // pred_fallthru
      _
    // Predicated region
    $region10: #{tpu_custom_call.1} parent=1 // pred_check
      _
    $region11: #{tpu_custom_call.1} parent=1 // pred_check_branch
      %42 = sbr.rel (0) target = $region13
    $region12: #{tpu_custom_call.1} parent=1 // pred_region
      _
    $region13: #{tpu_custom_call.1} parent=1 // pred_fallthru
      _
    // Predicated region
    $region14: #{tpu_custom_call.1} parent=1 // pred_check
      _
    $region15: #{tpu_custom_call.1} parent=1 // pred_check_branch
      %44 = sbr.rel (0) target = $region17
    $region16: #{tpu_custom_call.1} parent=1 // pred_region
      %46 = vsyncadd [#allocation7], 0
      %s47 = sshll.u32 %s3, 4
      %s48 = int_to_ptr.hbm [resolvable:$true] %s47
      %s49 = sshll.u32 [#allocation8], 4
      %s50 = int_to_ptr.vmem [resolvable:$true] %s49
      %55 = dma.hbm_to_vmem [thread:$0]  %s48, 512, %s50, [#allocation7], 128, 128, 8
    $region17: #{tpu_custom_call.1} parent=1 // pred_fallthru
      _
    // Predicated region
    $region18: #{tpu_custom_call.1} parent=1 // pred_check
      _
    $region19: #{tpu_custom_call.1} parent=1 // pred_check_branch
      %57 = sbr.rel (0) target = $region21
    $region20: #{tpu_custom_call.1} parent=1 // pred_region
      %59 = vsyncadd [#allocation10], 0
      %s60 = sshll.u32 %s4, 4
      %s61 = int_to_ptr.hbm [resolvable:$true] %s60
      %s62 = sshll.u32 [#allocation9], 4
      %s63 = int_to_ptr.vmem [resolvable:$true] %s62
      %68 = dma.hbm_to_vmem [thread:$0]  %s61, 512, %s63, [#allocation10], 128, 128, 8
    $region21: #{tpu_custom_call.1} parent=1 // pred_fallthru
      _
    // Predicated region
    $region22: #{tpu_custom_call.1} parent=1 // pred_check
      _
    $region23: #{tpu_custom_call.1} parent=1 // pred_check_branch
      %70 = sbr.rel (0) target = $region25
    $region24: #{tpu_custom_call.1} parent=1 // pred_region
      _
    $region25: #{tpu_custom_call.1} parent=1 // pred_fallthru
      _
    // Predicated region
    $region26: #{tpu_custom_call.1} parent=1 // pred_check
      _
    $region27: #{tpu_custom_call.1} parent=1 // pred_check_branch
      %72 = sbr.rel (0) target = $region29
    $region28: #{tpu_custom_call.1} parent=1 // pred_region
      %74 = dma.done [#allocation4], 16
    $region29: #{tpu_custom_call.1} parent=1 // pred_fallthru
      _
    // Predicated region
    $region30: #{tpu_custom_call.1} parent=1 // pred_check
      _
    $region31: #{tpu_custom_call.1} parent=1 // pred_check_branch
      %76 = sbr.rel (0) target = $region33
    $region32: #{tpu_custom_call.1} parent=1 // pred_region
      %78 = dma.done [#allocation7], 16
    $region33: #{tpu_custom_call.1} parent=1 // pred_fallthru
      _
    // Predicated region
    $region34: #{tpu_custom_call.1} parent=1 // pred_check
      _
    $region35: #{tpu_custom_call.1} parent=1 // pred_check_branch
      %80 = sbr.rel (0) target = $region37
    $region36: #{tpu_custom_call.1} parent=1 // pred_region
      %82 = dma.done [#allocation7], 512
    $region37: #{tpu_custom_call.1} parent=1 // pred_fallthru
      _
    // Predicated region
    $region38: #{tpu_custom_call.1} parent=1 // pred_check
      _
    $region39: #{tpu_custom_call.1} parent=1 // pred_check_branch
      %84 = sbr.rel (0) target = $region41
    $region40: #{tpu_custom_call.1} parent=1 // pred_region
      %86 = dma.done [#allocation10], 512
    $region41: #{tpu_custom_call.1} parent=1 // pred_fallthru
      _
    %v87 = vld [vmem:[#allocation3] sm:$0x1]
    %v88 = vld [vmem:[#allocation8] sm:$0xff]
    %v89 = vld [vmem:[#allocation8 + $0x8] sm:$0xff]
    %v90 = vld [vmem:[#allocation8 + $0x10] sm:$0xff]
    %v91 = vld [vmem:[#allocation8 + $0x18] sm:$0xff]
    %v92 = vld [vmem:[%s5] sm:$0x1]
    %vm93 = vcmask 261120
    %v95 = vsel %vm93, %v87, 0
    %97 = vmatpush.msra.mxu0 0.0
    %98 = vmatpush.msra.mxu0 0.0
    %99 = vmatpush.msra.mxu0 0.0
    %100 = vmatpush.msra.mxu0 0.0
    %101 = vmatpush.msra.mxu0 0.0
    %102 = vmatpush.msra.mxu0 0.0
    %103 = vmatpush.msra.mxu0 0.0
    %104 = vmatpush.msra.mxu0 0.0
    %105 = vmatpush.msra.mxu0 0.0
    %106 = vmatpush.msra.mxu0 0.0
    %107 = vmatpush.msra.mxu0 0.0
    %108 = vmatpush.msra.mxu0 0.0
    %109 = vmatpush.msra.mxu0 %v91
    %110 = vmatpush.msra.mxu0 %v90
    %111 = vmatpush.msra.mxu0 %v89
    %112 = vmatpush.msra.mxu0 %v88
    %113 = vmatmul.f32.gmra.mxu0 %v95
    %v114 = vpop.f32.mrf.mxu0
    %v115 = vadd.f32 %v92, %v114
    %116 = vdwg.mxu0
    %117 = vst [vmem:[#allocation2] sm:$0x1] %v115
    %v118 = vld [vmem:[#allocation9] sm:$0xff]
    %v119 = vld [vmem:[#allocation9 + $0x8] sm:$0xff]
    %v120 = vld [vmem:[#allocation9 + $0x10] sm:$0xff]
    %v121 = vld [vmem:[#allocation9 + $0x18] sm:$0xff]
    %v122 = vld [vmem:[#allocation6] sm:$0x1]
    %v123 = vld [vmem:[%s2] sm:$0x1]
    %v124 = vld [vmem:[#allocation2] sm:$0x1]
    %v126 = vsel %vm93, %v122, 0
    %128 = vmatpush.msra.mxu0 0.0
    %129 = vmatpush.msra.mxu0 0.0
    %130 = vmatpush.msra.mxu0 0.0
    %131 = vmatpush.msra.mxu0 0.0
    %132 = vmatpush.msra.mxu0 0.0
    %133 = vmatpush.msra.mxu0 0.0
    %134 = vmatpush.msra.mxu0 0.0
    %135 = vmatpush.msra.mxu0 0.0
    %136 = vmatpush.msra.mxu0 0.0
    %137 = vmatpush.msra.mxu0 0.0
    %138 = vmatpush.msra.mxu0 0.0
    %139 = vmatpush.msra.mxu0 0.0
    %140 = vmatpush.msra.mxu0 %v121
    %141 = vmatpush.msra.mxu0 %v120
    %142 = vmatpush.msra.mxu0 %v119
    %143 = vmatpush.msra.mxu0 %v118
    %144 = vmatmul.f32.gmra.mxu0 %v126
    %v145 = vpop.f32.mrf.mxu0
    %v146 = vadd.f32 0.0, %v145
    %147 = vdwg.mxu0
    %v148 = vadd.f32 %v124, %v146
    %v149 = vtanh.pop %v148
    %v150 = vmul.f32 %v149, 0.5
    %v151 = vadd.f32 %v150, 0.5
    %153 = vrot.lane.b32.xlu0 %v123, 32
    %v154 = vpop.permute.xlu0 %153
    %v156 = vmul.f32 %v151, %v154
    %158 = vrot.lane.b32.xlu0 %v149, 64
    %v159 = vpop.permute.xlu0 %158
    %v161 = vmul.f32 %v151, %v159
    %163 = vrot.lane.b32.xlu0 %v161, 32
    %v164 = vpop.permute.xlu0 %163
    %v166 = vadd.f32 %v156, %v164
    %v167 = vtanh.pop %v166
    %169 = vrot.lane.b32.xlu0 %v167, 64
    %v170 = vpop.permute.xlu0 %169
    %v172 = vmul.f32 %v151, %v170
    %v174 = vperm.slane %v172, 0
    %175 = vrot.lane.b32.xlu0 %v174, 32
    %v176 = vpop.permute.xlu0 %175
    %vm178 = vcmask 253952
    %179 = vst.msk [vmem:[#allocation11] sm:$0x1] %vm178, %v176
    %180 = vst.msk [vmem:[#allocation12] sm:$0x1] %vm178, %v176
    %v182 = vperm.slane %v166, 0
    %183 = vrot.lane.b32.xlu0 %v182, 96
    %v184 = vpop.permute.xlu0 %183
    %186 = vst.msk [vmem:[#allocation14] sm:$0x1] %vm178, %v184
    // Predicated region
    $region42: #{tpu_custom_call.1} parent=1 // pred_check
      _
    $region43: #{tpu_custom_call.1} parent=1 // pred_check_branch
      %188 = sbr.rel (0) target = $region45
    $region44: #{tpu_custom_call.1} parent=1 // pred_region
      %190 = vsyncadd [#allocation5], 0
      %s192 = sshll.u32 [#allocation11], 4
      %s193 = int_to_ptr.vmem [resolvable:$true] %s192
      %s194 = sshll.u32 %s6, 4
      %s195 = int_to_ptr.hbm [resolvable:$true] %s194
      %197 = dma.vmem_to_hbm [thread:$0]  %s193, 16, %s195, [#allocation5]
    $region45: #{tpu_custom_call.1} parent=1 // pred_fallthru
      _
    // Predicated region
    $region46: #{tpu_custom_call.1} parent=1 // pred_check
      _
    $region47: #{tpu_custom_call.1} parent=1 // pred_check_branch
      %199 = sbr.rel (0) target = $region49
    $region48: #{tpu_custom_call.1} parent=1 // pred_region
      %201 = vsyncadd [#allocation13], 0
      %s203 = sshll.u32 [#allocation12], 4
      %s204 = int_to_ptr.vmem [resolvable:$true] %s203
      %s205 = sshll.u32 %s7, 4
      %s206 = int_to_ptr.hbm [resolvable:$true] %s205
      %208 = dma.vmem_to_hbm [thread:$0]  %s204, 16, %s206, [#allocation13]
    $region49: #{tpu_custom_call.1} parent=1 // pred_fallthru
      _
    // Predicated region
    $region50: #{tpu_custom_call.1} parent=1 // pred_check
      _
    $region51: #{tpu_custom_call.1} parent=1 // pred_check_branch
      %210 = sbr.rel (0) target = $region53
    $region52: #{tpu_custom_call.1} parent=1 // pred_region
      %212 = vsyncadd [#allocation13], 0
      %s214 = sshll.u32 [#allocation14], 4
      %s215 = int_to_ptr.vmem [resolvable:$true] %s214
      %s216 = sshll.u32 %s8, 4
      %s217 = int_to_ptr.hbm [resolvable:$true] %s216
      %219 = dma.vmem_to_hbm [thread:$0]  %s215, 16, %s217, [#allocation13]
    $region53: #{tpu_custom_call.1} parent=1 // pred_fallthru
      _
    // Predicated region
    $region54: #{tpu_custom_call.1} parent=1 // pred_check
      _
    $region55: #{tpu_custom_call.1} parent=1 // pred_check_branch
      %221 = sbr.rel (0) target = $region57
    $region56: #{tpu_custom_call.1} parent=1 // pred_region
      %223 = dma.done [#allocation5], 16
    $region57: #{tpu_custom_call.1} parent=1 // pred_fallthru
      _
    // Predicated region
    $region58: #{tpu_custom_call.1} parent=1 // pred_check
      _
    $region59: #{tpu_custom_call.1} parent=1 // pred_check_branch
      %225 = sbr.rel (0) target = $region61
    $region60: #{tpu_custom_call.1} parent=1 // pred_region
      %227 = dma.done [#allocation13], 16
    $region61: #{tpu_custom_call.1} parent=1 // pred_fallthru
      _
    // Predicated region
    $region62: #{tpu_custom_call.1} parent=1 // pred_check
      _
    $region63: #{tpu_custom_call.1} parent=1 // pred_check_branch
      %229 = sbr.rel (0) target = $region65
    $region64: #{tpu_custom_call.1} parent=1 // pred_region
      %231 = dma.done [#allocation13], 16
    $region65: #{tpu_custom_call.1} parent=1 // pred_fallthru
      _
    %232 = vsyncpa [#allocation4], 1
    %233 = vsyncpa [#allocation7], 1
    %234 = vsyncpa [#allocation10], 1
    %235 = vsyncpa [#allocation5], 1
    %236 = vsyncpa [#allocation13], 1

</llo_original>
